<compile_context>
chip_gen: v7x
topology: tpu7x:2x2x1
jax: 0.10.0
libtpu: 0.0.40
codegen_flags: <defaults>
</compile_context>

<pallas_src>
import functools

import jax
import jax.numpy as jnp
from jax import lax
from jax.experimental import pallas as pl
from jax.experimental.pallas import tpu as pltpu


_NEG_BIG = -1e30  # finite "minus infinity" sentinel (avoids inf-inf NaNs)


def _odds_ratio_kernel(logits_ref, win_ref, lose_ref, ratio_ref,
                       m_sc, denom_sc, wlog_sc, llog_sc,
                       *, n_rows, n_classes, tq, tc, mask_cols):
    i = pl.program_id(0)            # row-tile index   ("parallel")
    j = pl.program_id(1)            # class-tile index ("arbitrary", innermost)
    n_ct = pl.num_programs(1)

    @pl.when(j == 0)
    def _():
        m_sc[...] = jnp.full_like(m_sc, _NEG_BIG)
        denom_sc[...] = jnp.zeros_like(denom_sc)
        wlog_sc[...] = jnp.zeros_like(wlog_sc)
        llog_sc[...] = jnp.zeros_like(llog_sc)

    x = logits_ref[...].astype(jnp.float32)           # (tq, tc) f32 math
    win = win_ref[...]                                 # (tq, 1) int32
    lose = lose_ref[...]                               # (tq, 1) int32

    # Global class index of each lane in this tile.
    col = lax.broadcasted_iota(jnp.int32, x.shape, 1) + j * tc
    if mask_cols:  # only when class tiles can overhang C (static decision)
        x = jnp.where(col < n_classes, x, _NEG_BIG)

    # Online (flash-style) max / denominator accumulation.
    m_prev = m_sc[...]
    m_new = jnp.maximum(m_prev, jnp.max(x, axis=-1, keepdims=True))
    e = jnp.exp(x - m_new)
    denom_sc[...] = (denom_sc[...] * jnp.exp(m_prev - m_new)
                     + jnp.sum(e, axis=-1, keepdims=True))
    m_sc[...] = m_new

    # Per-row gather of winning / losing logits via masked lane reductions;
    # each class index falls in exactly one class tile, so += accumulates it.
    wlog_sc[...] += jnp.sum(jnp.where(col == win, x, 0.0), axis=-1, keepdims=True)
    llog_sc[...] += jnp.sum(jnp.where(col == lose, x, 0.0), axis=-1, keepdims=True)

    @pl.when(j == n_ct - 1)
    def _():
        m = m_sc[...]
        denom = denom_sc[...]
        wl = wlog_sc[...]
        ll = llog_sc[...]
        we = jnp.exp(wl - m)                 # tiny (tq,1) EUP exps, not (tq,tc)
        le = jnp.exp(ll - m)
        # log(odds_w / odds_l); the row-max terms cancel.
        log_or = (wl - ll) - jnp.log(denom - we) + jnp.log(denom - le)
        # ratio = -log(sigmoid(log_or)) = softplus(-log_or), computed stably.
        ratio = jnp.maximum(-log_or, 0.0) + jnp.log1p(jnp.exp(-jnp.abs(log_or)))
        row = lax.broadcasted_iota(jnp.int32, ratio.shape, 0) + i * tq
        ratio = jnp.where(row < n_rows, ratio, 0.0)    # zero the tail-row overhang
        ratio_ref[...] = ratio


def _round_up(v, m):
    return ((v + m - 1) // m) * m


def odds_ratio_loss(logits, labels, *, reduction="mean",
                    class_tile=None, row_tile=None):
    """Forward pass of OddsRatioLoss.

    logits: (N, C) float array (N = b*l rows, C = num_used_classes), any float dtype.
    labels: (N, 2) int array; column 0 = winning class, column 1 = losing class.
    """
    if reduction not in ("mean", "sum"):
        raise ValueError("Reduction is not implemented!")
    # TODO(synk): torch's runtime `assert all(winning != losing)` has no traced-JAX
    # equivalent inside jit; inputs are assumed valid.

    n, c = logits.shape

    # ----- class (lane) tiling: single full-width tile for moderate C, else
    #       lane-dense 2048-wide tiles with an online softmax over the class axis.
    if class_tile is None:
        tc = c if c <= 8192 else 2048
    else:
        tc = int(class_tile)
    if tc >= c:
        tc = c
    elif tc % 128 != 0:
        raise ValueError("class_tile must equal num_classes or be a multiple of 128")
    g_cls = pl.cdiv(c, tc)
    mask_cols = (c % tc) != 0

    # ----- row (sublane) tiling: ~4 MiB f32 working tile, but keep >=4 row
    #       tiles when possible so the "parallel" axis feeds both v7x cores.
    if row_tile is None:
        target_f32_bytes = 4 << 20
        tq = max(8, (target_f32_bytes // (4 * tc)) // 8 * 8)
        tq = min(tq, 4096)
        tq = min(tq, _round_up(pl.cdiv(n, 4), 8))
        tq = max(tq, 8)
    else:
        tq = max(8, _round_up(int(row_tile), 8))
    g_rows = pl.cdiv(n, tq)

    # Tiny (N,1) label columns; the big logits array is passed untouched in its
    # native dtype (no host-side pad / f32 cast).
    win_col = labels[:, 0:1].astype(jnp.int32)
    lose_col = labels[:, 1:2].astype(jnp.int32)

    kernel = functools.partial(
        _odds_ratio_kernel,
        n_rows=n, n_classes=c, tq=tq, tc=tc, mask_cols=mask_cols)

    per_row = pl.pallas_call(
        kernel,
        grid=(g_rows, g_cls),
        in_specs=[
            pl.BlockSpec((tq, tc), lambda i, j: (i, j)),
            pl.BlockSpec((tq, 1), lambda i, j: (i, 0)),
            pl.BlockSpec((tq, 1), lambda i, j: (i, 0)),
        ],
        out_specs=pl.BlockSpec((tq, 1), lambda i, j: (i, 0)),
        out_shape=jax.ShapeDtypeStruct((n, 1), jnp.float32),
        scratch_shapes=[pltpu.VMEM((tq, 1), jnp.float32) for _ in range(4)],
        compiler_params=pltpu.CompilerParams(
            dimension_semantics=("parallel", "arbitrary")),
    )(logits, win_col, lose_col)

    total = jnp.sum(per_row)
    if reduction == "mean":
        return total / jnp.float32(n)
    return total


def _reference_loss(logits, labels, reduction):
    """Pure-JAX transliteration of the torch forward (sanity check)."""
    x = logits.astype(jnp.float32)
    win = labels[:, 0]
    lose = labels[:, 1]
    probs = jax.nn.softmax(x, axis=1)
    idx = jnp.arange(x.shape[0])
    wp = probs[idx, win]
    lp = probs[idx, lose]
    wo = wp / (1.0 - wp)
    lo = lp / (1.0 - lp)
    ratio = -jnp.log(jax.nn.sigmoid(jnp.log(wo / lo)))
    return jnp.mean(ratio) if reduction == "mean" else jnp.sum(ratio)


def _make_inputs(key, n, c, dtype):
    kx, kw, kl = jax.random.split(key, 3)
    logits = (2.0 * jax.random.normal(kx, (n, c), dtype=jnp.float32)).astype(dtype)
    win = jax.random.randint(kw, (n,), 0, c, dtype=jnp.int32)
    lose = (win + jax.random.randint(kl, (n,), 1, c, dtype=jnp.int32)) % c
    labels = jnp.stack([win, lose], axis=1)
    return logits, labels


if __name__ == "__main__":
    key = jax.random.PRNGKey(0)
    B, L = 2, 8                        # N = b*l = 16 rows
    N = B * L
    ok = True

    # 1) f32 logits, single class tile, both reductions.
    logits, labels = _make_inputs(key, N, 128, jnp.float32)
    for reduction in ("mean", "sum"):
        loss = jax.block_until_ready(odds_ratio_loss(logits, labels, reduction=reduction))
        ref = _reference_loss(logits, labels, reduction)
        ok &= bool(jnp.isfinite(loss)) and bool(jnp.allclose(loss, ref, rtol=1e-3, atol=1e-4))
        assert ok, (reduction, loss, ref)

    # 2) f32 logits, forced class tiling (online-softmax path over 2 class tiles).
    logits2, labels2 = _make_inputs(jax.random.PRNGKey(1), N, 256, jnp.float32)
    loss2 = jax.block_until_ready(
        odds_ratio_loss(logits2, labels2, reduction="mean", class_tile=128))
    ref2 = _reference_loss(logits2, labels2, "mean")
    ok &= bool(jnp.allclose(loss2, ref2, rtol=1e-3, atol=1e-4))
    assert ok, ("class-tiled", loss2, ref2)

    # 3) bf16 logits fed in native dtype (kernel widens per-tile to f32).
    logits3, labels3 = _make_inputs(jax.random.PRNGKey(2), N, 128, jnp.bfloat16)
    loss3 = jax.block_until_ready(odds_ratio_loss(logits3, labels3, reduction="mean"))
    ref3 = _reference_loss(logits3, labels3, "mean")
    ok &= bool(jnp.allclose(loss3, ref3, rtol=5e-3, atol=1e-3))
    assert ok, ("bf16", loss3, ref3)

    print("KERNEL_OK")
</pallas_src>

<mosaic_0001>
module attributes {stable_mosaic.version = 11 : i64} {
  func.func @_odds_ratio_kernel(%arg0: i32, %arg1: i32, %arg2: memref<8x128xf32, #tpu.memory_space<vmem>>, %arg3: memref<8x1xi32, #tpu.memory_space<vmem>>, %arg4: memref<8x1xi32, #tpu.memory_space<vmem>>, %arg5: memref<8x1xf32, #tpu.memory_space<vmem>>, %arg6: memref<8x1xf32, #tpu.memory_space<vmem>>, %arg7: memref<8x1xf32, #tpu.memory_space<vmem>>, %arg8: memref<8x1xf32, #tpu.memory_space<vmem>>, %arg9: memref<8x1xf32, #tpu.memory_space<vmem>>) attributes {dimension_semantics = [#tpu.dimension_semantics<parallel>, #tpu.dimension_semantics<arbitrary>], iteration_bounds = array<i64: 2, 1>, scalar_prefetch = 0 : i64, scratch_operands = 4 : i64, tpu.core_type = #tpu.core_type<tc>, window_params = [{transform_indices = @transform_0, window_bounds = array<i64: 8, 128>}, {transform_indices = @transform_1, window_bounds = array<i64: 8, 1>}, {transform_indices = @transform_2, window_bounds = array<i64: 8, 1>}, {transform_indices = @transform_3, window_bounds = array<i64: 8, 1>}]} {
    %c0_i32 = arith.constant 0 : i32
    %0 = arith.cmpi eq, %arg1, %c0_i32 : i32
    %1 = arith.extui %0 : i1 to i32
    %c0_i32_0 = arith.constant 0 : i32
    %2 = arith.cmpi ne, %1, %c0_i32_0 : i32
    scf.if %2 {
      %cst_29 = arith.constant -1.000000e+30 : f32
      %47 = vector.broadcast %cst_29 : f32 to vector<8x1xf32>
      %c0_30 = arith.constant 0 : index
      %c0_31 = arith.constant 0 : index
      %48 = vector.load %arg6[%c0_30, %c0_31] : memref<8x1xf32, #tpu.memory_space<vmem>>, vector<8x1xf32>
      tpu.vector_store %arg6[%c0_30, %c0_31], %47 {strides = array<i32>} : memref<8x1xf32, #tpu.memory_space<vmem>>, vector<8x1xf32>,
      %cst_32 = arith.constant 0.000000e+00 : f32
      %49 = vector.broadcast %cst_32 : f32 to vector<8x1xf32>
      %c0_33 = arith.constant 0 : index
      %c0_34 = arith.constant 0 : index
      %50 = vector.load %arg7[%c0_33, %c0_34] : memref<8x1xf32, #tpu.memory_space<vmem>>, vector<8x1xf32>
      tpu.vector_store %arg7[%c0_33, %c0_34], %49 {strides = array<i32>} : memref<8x1xf32, #tpu.memory_space<vmem>>, vector<8x1xf32>,
      %cst_35 = arith.constant 0.000000e+00 : f32
      %51 = vector.broadcast %cst_35 : f32 to vector<8x1xf32>
      %c0_36 = arith.constant 0 : index
      %c0_37 = arith.constant 0 : index
      %52 = vector.load %arg8[%c0_36, %c0_37] : memref<8x1xf32, #tpu.memory_space<vmem>>, vector<8x1xf32>
      tpu.vector_store %arg8[%c0_36, %c0_37], %51 {strides = array<i32>} : memref<8x1xf32, #tpu.memory_space<vmem>>, vector<8x1xf32>,
      %cst_38 = arith.constant 0.000000e+00 : f32
      %53 = vector.broadcast %cst_38 : f32 to vector<8x1xf32>
      %c0_39 = arith.constant 0 : index
      %c0_40 = arith.constant 0 : index
      %54 = vector.load %arg9[%c0_39, %c0_40] : memref<8x1xf32, #tpu.memory_space<vmem>>, vector<8x1xf32>
      tpu.vector_store %arg9[%c0_39, %c0_40], %53 {strides = array<i32>} : memref<8x1xf32, #tpu.memory_space<vmem>>, vector<8x1xf32>,
    } else {
    }
    %c0 = arith.constant 0 : index
    %c0_1 = arith.constant 0 : index
    %3 = vector.load %arg2[%c0, %c0_1] : memref<8x128xf32, #tpu.memory_space<vmem>>, vector<8x128xf32>
    %c0_2 = arith.constant 0 : index
    %c0_3 = arith.constant 0 : index
    %4 = vector.load %arg3[%c0_2, %c0_3] : memref<8x1xi32, #tpu.memory_space<vmem>>, vector<8x1xi32>
    %c0_4 = arith.constant 0 : index
    %c0_5 = arith.constant 0 : index
    %5 = vector.load %arg4[%c0_4, %c0_5] : memref<8x1xi32, #tpu.memory_space<vmem>>, vector<8x1xi32>
    %6 = tpu.iota {dimensions = array<i32: 1>} : vector<8x128xi32>
    %c128_i32 = arith.constant 128 : i32
    %7 = arith.muli %arg1, %c128_i32 : i32
    %8 = vector.broadcast %7 : i32 to vector<8x128xi32>
    %9 = arith.addi %6, %8 : vector<8x128xi32>
    %c0_6 = arith.constant 0 : index
    %c0_7 = arith.constant 0 : index
    %10 = vector.load %arg6[%c0_6, %c0_7] : memref<8x1xf32, #tpu.memory_space<vmem>>, vector<8x1xf32>
    %cst = arith.constant dense<0xFF800000> : vector<8xf32>
    %11 = vector.multi_reduction <maximumf>, %3, %cst [1] : vector<8x128xf32> to vector<8xf32>
    %12 = vector.shape_cast %11 : vector<8xf32> to vector<8x1xf32>
    %13 = arith.maximumf %10, %12 : vector<8x1xf32>
    %14 = vector.broadcast %13 : vector<8x1xf32> to vector<8x128xf32>
    %15 = arith.subf %3, %14 : vector<8x128xf32>
    %16 = math.exp %15 : vector<8x128xf32>
    %c0_8 = arith.constant 0 : index
    %c0_9 = arith.constant 0 : index
    %17 = vector.load %arg7[%c0_8, %c0_9] : memref<8x1xf32, #tpu.memory_space<vmem>>, vector<8x1xf32>
    %18 = arith.subf %10, %13 : vector<8x1xf32>
    %19 = math.exp %18 : vector<8x1xf32>
    %20 = arith.mulf %17, %19 : vector<8x1xf32>
    %cst_10 = arith.constant dense<0.000000e+00> : vector<8xf32>
    %21 = vector.multi_reduction <add>, %16, %cst_10 [1] : vector<8x128xf32> to vector<8xf32>
    %22 = vector.shape_cast %21 : vector<8xf32> to vector<8x1xf32>
    %23 = arith.addf %20, %22 : vector<8x1xf32>
    %c0_11 = arith.constant 0 : index
    %c0_12 = arith.constant 0 : index
    %24 = vector.load %arg7[%c0_11, %c0_12] : memref<8x1xf32, #tpu.memory_space<vmem>>, vector<8x1xf32>
    tpu.vector_store %arg7[%c0_11, %c0_12], %23 {strides = array<i32>} : memref<8x1xf32, #tpu.memory_space<vmem>>, vector<8x1xf32>,
    %c0_13 = arith.constant 0 : index
    %c0_14 = arith.constant 0 : index
    %25 = vector.load %arg6[%c0_13, %c0_14] : memref<8x1xf32, #tpu.memory_space<vmem>>, vector<8x1xf32>
    tpu.vector_store %arg6[%c0_13, %c0_14], %13 {strides = array<i32>} : memref<8x1xf32, #tpu.memory_space<vmem>>, vector<8x1xf32>,
    %c0_15 = arith.constant 0 : index
    %c0_16 = arith.constant 0 : index
    %26 = vector.load %arg8[%c0_15, %c0_16] : memref<8x1xf32, #tpu.memory_space<vmem>>, vector<8x1xf32>
    %27 = vector.broadcast %4 : vector<8x1xi32> to vector<8x128xi32>
    %28 = arith.cmpi eq, %9, %27 : vector<8x128xi32>
    %cst_17 = arith.constant 0.000000e+00 : f32
    %29 = vector.broadcast %cst_17 : f32 to vector<8x128xf32>
    %30 = arith.select %28, %3, %29 : vector<8x128xi1>, vector<8x128xf32>
    %cst_18 = arith.constant dense<0.000000e+00> : vector<8xf32>
    %31 = vector.multi_reduction <add>, %30, %cst_18 [1] : vector<8x128xf32> to vector<8xf32>
    %32 = vector.shape_cast %31 : vector<8xf32> to vector<8x1xf32>
    %33 = arith.addf %26, %32 : vector<8x1xf32>
    %c0_19 = arith.constant 0 : index
    %c0_20 = arith.constant 0 : index
    %34 = vector.load %arg8[%c0_19, %c0_20] : memref<8x1xf32, #tpu.memory_space<vmem>>, vector<8x1xf32>
    tpu.vector_store %arg8[%c0_19, %c0_20], %33 {strides = array<i32>} : memref<8x1xf32, #tpu.memory_space<vmem>>, vector<8x1xf32>,
    %c0_21 = arith.constant 0 : index
    %c0_22 = arith.constant 0 : index
    %35 = vector.load %arg9[%c0_21, %c0_22] : memref<8x1xf32, #tpu.memory_space<vmem>>, vector<8x1xf32>
    %36 = vector.broadcast %5 : vector<8x1xi32> to vector<8x128xi32>
    %37 = arith.cmpi eq, %9, %36 : vector<8x128xi32>
    %cst_23 = arith.constant 0.000000e+00 : f32
    %38 = vector.broadcast %cst_23 : f32 to vector<8x128xf32>
    %39 = arith.select %37, %3, %38 : vector<8x128xi1>, vector<8x128xf32>
    %cst_24 = arith.constant dense<0.000000e+00> : vector<8xf32>
    %40 = vector.multi_reduction <add>, %39, %cst_24 [1] : vector<8x128xf32> to vector<8xf32>
    %41 = vector.shape_cast %40 : vector<8xf32> to vector<8x1xf32>
    %42 = arith.addf %35, %41 : vector<8x1xf32>
    %c0_25 = arith.constant 0 : index
    %c0_26 = arith.constant 0 : index
    %43 = vector.load %arg9[%c0_25, %c0_26] : memref<8x1xf32, #tpu.memory_space<vmem>>, vector<8x1xf32>
    tpu.vector_store %arg9[%c0_25, %c0_26], %42 {strides = array<i32>} : memref<8x1xf32, #tpu.memory_space<vmem>>, vector<8x1xf32>,
    %c0_i32_27 = arith.constant 0 : i32
    %44 = arith.cmpi eq, %arg1, %c0_i32_27 : i32
    %45 = arith.extui %44 : i1 to i32
    %c0_i32_28 = arith.constant 0 : i32
    %46 = arith.cmpi ne, %45, %c0_i32_28 : i32
    scf.if %46 {
      %c0_29 = arith.constant 0 : index
      %c0_30 = arith.constant 0 : index
      %47 = vector.load %arg6[%c0_29, %c0_30] : memref<8x1xf32, #tpu.memory_space<vmem>>, vector<8x1xf32>
      %c0_31 = arith.constant 0 : index
      %c0_32 = arith.constant 0 : index
      %48 = vector.load %arg7[%c0_31, %c0_32] : memref<8x1xf32, #tpu.memory_space<vmem>>, vector<8x1xf32>
      %c0_33 = arith.constant 0 : index
      %c0_34 = arith.constant 0 : index
      %49 = vector.load %arg8[%c0_33, %c0_34] : memref<8x1xf32, #tpu.memory_space<vmem>>, vector<8x1xf32>
      %c0_35 = arith.constant 0 : index
      %c0_36 = arith.constant 0 : index
      %50 = vector.load %arg9[%c0_35, %c0_36] : memref<8x1xf32, #tpu.memory_space<vmem>>, vector<8x1xf32>
      %51 = arith.subf %49, %47 : vector<8x1xf32>
      %52 = math.exp %51 : vector<8x1xf32>
      %53 = arith.subf %50, %47 : vector<8x1xf32>
      %54 = math.exp %53 : vector<8x1xf32>
      %55 = arith.subf %49, %50 : vector<8x1xf32>
      %56 = arith.subf %48, %52 : vector<8x1xf32>
      %57 = math.log %56 : vector<8x1xf32>
      %58 = arith.subf %55, %57 : vector<8x1xf32>
      %59 = arith.subf %48, %54 : vector<8x1xf32>
      %60 = math.log %59 : vector<8x1xf32>
      %61 = arith.addf %58, %60 : vector<8x1xf32>
      %cst_37 = arith.constant 0.000000e+00 : f32
      %62 = vector.broadcast %cst_37 : f32 to vector<8x1xf32>
      %63 = arith.subf %62, %61 : vector<8x1xf32>
      %cst_38 = arith.constant 0.000000e+00 : f32
      %64 = vector.broadcast %cst_38 : f32 to vector<8x1xf32>
      %65 = arith.maximumf %63, %64 : vector<8x1xf32>
      %66 = math.absf %61 : vector<8x1xf32>
      %cst_39 = arith.constant 0.000000e+00 : f32
      %67 = vector.broadcast %cst_39 : f32 to vector<8x1xf32>
      %68 = arith.subf %67, %66 : vector<8x1xf32>
      %69 = math.exp %68 : vector<8x1xf32>
      %70 = math.log1p %69 : vector<8x1xf32>
      %71 = arith.addf %65, %70 : vector<8x1xf32>
      %72 = tpu.iota {dimensions = array<i32: 0>} : vector<8x1xi32>
      %c8_i32 = arith.constant 8 : i32
      %73 = arith.muli %arg0, %c8_i32 : i32
      %74 = vector.broadcast %73 : i32 to vector<8x1xi32>
      %75 = arith.addi %72, %74 : vector<8x1xi32>
      %c16_i32 = arith.constant 16 : i32
      %76 = vector.broadcast %c16_i32 : i32 to vector<8x1xi32>
      %77 = arith.cmpi slt, %75, %76 : vector<8x1xi32>
      %cst_40 = arith.constant 0.000000e+00 : f32
      %78 = vector.broadcast %cst_40 : f32 to vector<8x1xf32>
      %79 = arith.select %77, %71, %78 : vector<8x1xi1>, vector<8x1xf32>
      %c0_41 = arith.constant 0 : index
      %c0_42 = arith.constant 0 : index
      %80 = vector.load %arg5[%c0_41, %c0_42] : memref<8x1xf32, #tpu.memory_space<vmem>>, vector<8x1xf32>
      tpu.vector_store %arg5[%c0_41, %c0_42], %79 {strides = array<i32>} : memref<8x1xf32, #tpu.memory_space<vmem>>, vector<8x1xf32>,
    } else {
    }
    return
  }
  func.func @transform_0(%arg0: i32, %arg1: i32) -> (i32, i32) {
    %c0_i32 = arith.constant 0 : i32
    return %arg0, %arg1 : i32, i32
  }
  func.func @transform_1(%arg0: i32, %arg1: i32) -> (i32, i32) {
    %c0_i32 = arith.constant 0 : i32
    %c0_i32_0 = arith.constant 0 : i32
    return %arg0, %c0_i32 : i32, i32
  }
  func.func @transform_2(%arg0: i32, %arg1: i32) -> (i32, i32) {
    %c0_i32 = arith.constant 0 : i32
    %c0_i32_0 = arith.constant 0 : i32
    return %arg0, %c0_i32 : i32, i32
  }
  func.func @transform_3(%arg0: i32, %arg1: i32) -> (i32, i32) {
    %c0_i32 = arith.constant 0 : i32
    %c0_i32_0 = arith.constant 0 : i32
    return %arg0, %c0_i32 : i32, i32
  }
}

</mosaic_0001>

<llo_original>
// kernel: tpu_custom_call.1
$region0: #{tpu_custom_call.1}
  #allocation0 [shape = 'u32[]', space=smem, size = 0x4, offset = 0x4, fixed_abs, tag = 'smem constant byte address 0x4 - core index']
  #allocation1 [shape = 'u32[144,128]{1,0:T(1,128)}', space=vmem, size = 0x12000, scoped, tag = 'internal scratch']
  #allocation2 [shape = 'f32[8,1]{1,0:T(8,128)}', space=vmem, size = 0x1000, scoped, tag = 'scratch operand']
  #allocation3 [shape = 'f32[8,1]{1,0:T(8,128)}', space=vmem, size = 0x1000, scoped, tag = 'scratch operand']
  #allocation4 [shape = 'f32[8,1]{1,0:T(8,128)}', space=vmem, size = 0x1000, scoped, tag = 'scratch operand']
  #allocation5 [shape = 'f32[8,1]{1,0:T(8,128)}', space=vmem, size = 0x1000, scoped, tag = 'scratch operand']
  %s0 = inlined_call_operand.vmem [shape: f32[16,128], index: 0, kind: input, shape index: {}]
  %s1 = inlined_call_operand.vmem [shape: s32[16,1], index: 1, kind: input, shape index: {}]
  %s2 = inlined_call_operand.vmem [shape: s32[16,1], index: 2, kind: input, shape index: {}]
  %s3 = inlined_call_operand.vmem [shape: f32[16,1], index: 3, kind: output, shape index: {}]
  %s4 = sld [smem:[#allocation0]]
  $region53: #{tpu_custom_call.1} parent=0
    _
  %s6 = ssub.s32 1, %s4
  %s7 = scalar_select 0, %s6, %s4
  loop: start=0, step=1, limit=4
  $region2: #{tpu_custom_call.1} parent=0 // loop_pre_header
    _
  $region3: #{tpu_custom_call.1} parent=0 // loop_header
    %s9 = sphi 0, %s13
    %p10 = scmp.ge.s32.totalorder %s9, 4
    %s16 = sphi 0, %s28
    %s17 = sphi 0, %s24
    %s18 = sphi 0, %s16
    %s19 = sphi 0, %s17
    %s20 = sphi 0, %s18
    %s21 = sphi 0, %s19
    %s33 = sphi 0, %s35
    %s36 = sphi 0, %s33
    %s37 = sphi 0, %s36
    %s53 = sphi 0, %s37
    %s59 = sphi 0, %s61
    %s62 = sphi 0, %s59
    %s63 = sphi 0, %s62
    %s79 = sphi 0, %s63
    %s85 = sphi 0, %s87
    %s88 = sphi 0, %s85
    %s89 = sphi 0, %s88
    %s105 = sphi 0, %s89
    %s111 = sphi 0, %s113
    %s114 = sphi 0, %s111
    %s115 = sphi 0, %s114
    %s131 = sphi 0, %s115
  $region4: #{tpu_custom_call.1} parent=0 // loop_header_branch
    %12 = sbr.rel (%p10) target = $region8
  $region5: #{tpu_custom_call.1} parent=0 // loop_body
    %s14 = ssub.s32 %s9, 1
    %s15 = ssub.s32 %s9, 2
    %s22 = sadd.s32 1, %s17
    %p23 = scmp.ge.s32.totalorder %s22, 1
    %s24 = scalar_select %p23, 0, %s22
    %s25 = sadd.s32 1, %s16
    %s26 = scalar_select %p23, %s25, %s16
    %p27 = scmp.ge.s32.totalorder %s26, 2
    %s28 = scalar_select %p27, 0, %s26
    %s29 = ssub.s32 %s16, %s28
    %s30 = ssub.s32 %s17, %s24
    %s31 = sor.u32 %s29, %s30
    %p32 = scmp.eq.s32.totalorder %s31, 0
    %s34 = sadd.s32 %s33, 1
    %s35 = scalar_select %p32, %s33, %s34
    %p38 = pneg %p32
    %p39 = scmp.eq.s32.totalorder %s9, 1
    %p40 = por %p38, %p39
    %p41 = scmp.ne.s32.totalorder %s33, %s36
    %p42 = scmp.eq.s32.totalorder %s9, 0
    %p43 = por %p41, %p42
    %p44 = scmp.ne.s32.totalorder %s33, %s36
    %p45 = scmp.eq.s32.totalorder %s14, 1
    %p46 = por %p44, %p45
    %p47 = scmp.ne.s32.totalorder %s36, %s37
    %p48 = scmp.eq.s32.totalorder %s14, 0
    %p49 = por %p47, %p48
    %p50 = scmp.ne.s32.totalorder %s36, %s37
    %p51 = scmp.eq.s32.totalorder %s15, 1
    %p52 = por %p50, %p51
    %p54 = scmp.ne.s32.totalorder %s37, %s53
    %p55 = scmp.eq.s32.totalorder %s15, 0
    %p56 = por %p54, %p55
    %s57 = ssub.s32 %s16, %s28
    %p58 = scmp.eq.s32.totalorder %s57, 0
    %s60 = sadd.s32 %s59, 1
    %s61 = scalar_select %p58, %s59, %s60
    %p64 = pneg %p58
    %p65 = scmp.eq.s32.totalorder %s9, 1
    %p66 = por %p64, %p65
    %p67 = scmp.ne.s32.totalorder %s59, %s62
    %p68 = scmp.eq.s32.totalorder %s9, 0
    %p69 = por %p67, %p68
    %p70 = scmp.ne.s32.totalorder %s59, %s62
    %p71 = scmp.eq.s32.totalorder %s14, 1
    %p72 = por %p70, %p71
    %p73 = scmp.ne.s32.totalorder %s62, %s63
    %p74 = scmp.eq.s32.totalorder %s14, 0
    %p75 = por %p73, %p74
    %p76 = scmp.ne.s32.totalorder %s62, %s63
    %p77 = scmp.eq.s32.totalorder %s15, 1
    %p78 = por %p76, %p77
    %p80 = scmp.ne.s32.totalorder %s63, %s79
    %p81 = scmp.eq.s32.totalorder %s15, 0
    %p82 = por %p80, %p81
    %s83 = ssub.s32 %s16, %s28
    %p84 = scmp.eq.s32.totalorder %s83, 0
    %s86 = sadd.s32 %s85, 1
    %s87 = scalar_select %p84, %s85, %s86
    %p90 = pneg %p84
    %p91 = scmp.eq.s32.totalorder %s9, 1
    %p92 = por %p90, %p91
    %p93 = scmp.ne.s32.totalorder %s85, %s88
    %p94 = scmp.eq.s32.totalorder %s9, 0
    %p95 = por %p93, %p94
    %p96 = scmp.ne.s32.totalorder %s85, %s88
    %p97 = scmp.eq.s32.totalorder %s14, 1
    %p98 = por %p96, %p97
    %p99 = scmp.ne.s32.totalorder %s88, %s89
    %p100 = scmp.eq.s32.totalorder %s14, 0
    %p101 = por %p99, %p100
    %p102 = scmp.ne.s32.totalorder %s88, %s89
    %p103 = scmp.eq.s32.totalorder %s15, 1
    %p104 = por %p102, %p103
    %p106 = scmp.ne.s32.totalorder %s89, %s105
    %p107 = scmp.eq.s32.totalorder %s15, 0
    %p108 = por %p106, %p107
    %s109 = ssub.s32 %s16, %s28
    %p110 = scmp.eq.s32.totalorder %s109, 0
    %s112 = sadd.s32 %s111, 1
    %s113 = scalar_select %p110, %s111, %s112
    %p116 = pneg %p110
    %p117 = scmp.eq.s32.totalorder %s9, 1
    %p118 = por %p116, %p117
    %p119 = scmp.ne.s32.totalorder %s111, %s114
    %p120 = scmp.eq.s32.totalorder %s9, 0
    %p121 = por %p119, %p120
    %p122 = scmp.ne.s32.totalorder %s111, %s114
    %p123 = scmp.eq.s32.totalorder %s14, 1
    %p124 = por %p122, %p123
    %p125 = scmp.ne.s32.totalorder %s114, %s115
    %p126 = scmp.eq.s32.totalorder %s14, 0
    %p127 = por %p125, %p126
    %p128 = scmp.ne.s32.totalorder %s114, %s115
    %p129 = scmp.eq.s32.totalorder %s15, 1
    %p130 = por %p128, %p129
    %p132 = scmp.ne.s32.totalorder %s115, %s131
    %p133 = scmp.eq.s32.totalorder %s15, 0
    %p134 = por %p132, %p133
    %p135 = scmp.le.s32.totalorder 1, %s9
    %p136 = scmp.lt.s32.totalorder %s9, 3
    %p137 = pnand %p135, %p136
    %p138 = pneg %p137
    // Predicated region
    $region9: #{tpu_custom_call.1} parent=5 // pred_check
      _
    $region10: #{tpu_custom_call.1} parent=5 // pred_check_branch
      %140 = sbr.rel (%p137) target = $region12
    $region11: #{tpu_custom_call.1} parent=5 // pred_region
      %s141 = ssub.s32 %s9, 1
    $region12: #{tpu_custom_call.1} parent=5 // pred_fallthru
      _
    %p142 = scmp.lt.s32.totalorder %s9, 2
    // Predicated region
    $region13: #{tpu_custom_call.1} parent=5 // pred_check
      %p143 = pneg %p142
    $region14: #{tpu_custom_call.1} parent=5 // pred_check_branch
      %145 = sbr.rel (%p143) target = $region16
    $region15: #{tpu_custom_call.1} parent=5 // pred_region
      // Predicated region
      $region17: #{tpu_custom_call.1} parent=15 // pred_check
        %p146 = pneg %p43
      $region18: #{tpu_custom_call.1} parent=15 // pred_check_branch
        %148 = sbr.rel (%p146) target = $region20
      $region19: #{tpu_custom_call.1} parent=15 // pred_region
        %p149 = scmp.lt.s32.totalorder %s16, 1
        %s150 = scalar_select %p149, %s16, 1
        %p151 = scmp.lt.s32.totalorder %s17, 0
        %s152 = scalar_select %p151, %s17, 0
        %s153 = sadd.s32 %s152, %s150
        %s154 = smul.addr %s153, 8
        %s155 = scalar_lea.vmem %s0, %s154
      $region20: #{tpu_custom_call.1} parent=15 // pred_fallthru
        _
      // Predicated region
      $region21: #{tpu_custom_call.1} parent=15 // pred_check
        %p156 = pneg %p69
      $region22: #{tpu_custom_call.1} parent=15 // pred_check_branch
        %158 = sbr.rel (%p156) target = $region24
      $region23: #{tpu_custom_call.1} parent=15 // pred_region
        %p159 = scmp.lt.s32.totalorder %s16, 1
        %s160 = scalar_select %p159, %s16, 1
        %s161 = smul.addr %s160, 8
        %s162 = scalar_lea.vmem %s1, %s161
      $region24: #{tpu_custom_call.1} parent=15 // pred_fallthru
        _
      // Predicated region
      $region25: #{tpu_custom_call.1} parent=15 // pred_check
        %p163 = pneg %p95
      $region26: #{tpu_custom_call.1} parent=15 // pred_check_branch
        %165 = sbr.rel (%p163) target = $region28
      $region27: #{tpu_custom_call.1} parent=15 // pred_region
        %p166 = scmp.lt.s32.totalorder %s16, 1
        %s167 = scalar_select %p166, %s16, 1
        %s168 = smul.addr %s167, 8
        %s169 = scalar_lea.vmem %s2, %s168
      $region28: #{tpu_custom_call.1} parent=15 // pred_fallthru
        _
    $region16: #{tpu_custom_call.1} parent=5 // pred_fallthru
      _
    %p170 = scmp.le.s32.totalorder 1, %s9
    %p171 = scmp.lt.s32.totalorder %s9, 3
    %p172 = pnand %p170, %p171
    %p173 = pneg %p172
    // Predicated region
    $region29: #{tpu_custom_call.1} parent=5 // pred_check
      _
    $region30: #{tpu_custom_call.1} parent=5 // pred_check_branch
      %175 = sbr.rel (%p172) target = $region32
    $region31: #{tpu_custom_call.1} parent=5 // pred_region
      %s176 = ssub.s32 %s9, 1
      %p177 = scmp.lt.s32.totalorder %s18, 1
      %s178 = scalar_select %p177, %s18, 1
      %p179 = scmp.lt.s32.totalorder %s19, 0
      %s180 = scalar_select %p179, %s19, 0
      %s181 = sadd.s32 %s180, %s178
      %s182 = smul.addr %s181, 8
      %s183 = scalar_lea.vmem %s0, %s182
      %p184 = pneg %p49
      %p185 = pneg %p46
      %p186 = scmp.lt.s32.totalorder %s18, 1
      %s187 = scalar_select %p186, %s18, 1
      %s188 = smul.addr %s187, 8
      %s189 = scalar_lea.vmem %s1, %s188
      %p190 = pneg %p75
      %p191 = pneg %p72
      %p192 = scmp.lt.s32.totalorder %s18, 1
      %s193 = scalar_select %p192, %s18, 1
      %s194 = smul.addr %s193, 8
      %s195 = scalar_lea.vmem %s2, %s194
      %p196 = pneg %p101
      %p197 = pneg %p98
      %p198 = pneg %p127
      %p199 = pneg %p124
      %p200 = scmp.lt.s32.totalorder %s18, 1
      %s201 = scalar_select %p200, %s18, 1
      %s202 = smul.addr %s201, 8
      %s203 = scalar_lea.vmem %s3, %s202
      %p204 = scmp.lt.s32.totalorder %s18, 1
      %s205 = scalar_select %p204, %s18, 1
      %p206 = scmp.lt.s32.totalorder %s19, 0
      %s207 = scalar_select %p206, %s19, 0
      %s208 = sadd.s32 %s207, %s205
      %s209 = smul.addr %s208, 8
      %s210 = scalar_lea.vmem %s0, %s209
      %p211 = scmp.lt.s32.totalorder %s18, 1
      %s212 = scalar_select %p211, %s18, 1
      %s213 = smul.addr %s212, 8
      %s214 = scalar_lea.vmem %s1, %s213
      %p215 = scmp.lt.s32.totalorder %s18, 1
      %s216 = scalar_select %p215, %s18, 1
      %s217 = smul.addr %s216, 8
      %s218 = scalar_lea.vmem %s2, %s217
      %p219 = scmp.lt.s32.totalorder %s18, 1
      %s220 = scalar_select %p219, %s18, 1
      %s221 = smul.addr %s220, 8
      %s222 = scalar_lea.vmem %s3, %s221
      %p223 = scmp.eq.s32.totalorder %s19, 0
      // Predicated region
      $region33: #{tpu_custom_call.1} parent=31 // pred_check
        %p224 = pneg %p223
      $region34: #{tpu_custom_call.1} parent=31 // pred_check_branch
        %226 = sbr.rel (%p224) target = $region36
      $region35: #{tpu_custom_call.1} parent=31 // pred_region
        %vm227 = vcmask 7168
        %228 = vst.msk [vmem:[#allocation2] sm:$0xff] %vm227, -1e+30
        %229 = vst.msk [vmem:[#allocation3] sm:$0xff] %vm227, 0.0
        %230 = vst.msk [vmem:[#allocation4] sm:$0xff] %vm227, 0.0
        %231 = vst.msk [vmem:[#allocation5] sm:$0xff] %vm227, 0.0
      $region36: #{tpu_custom_call.1} parent=31 // pred_fallthru
        _
      %v232 = vld [vmem:[%s210] sm:$0xff]
      %v233 = vld [vmem:[%s214] sm:$0xff]
      %v234 = vld [vmem:[%s218] sm:$0xff]
      %v235 = vlaneseq
      %v236 = vand.u32 %v235, 127
      %s237 = smul.u32 %s19, 128
      %v238 = vstv %s237
      %v239 = vadd.s32 %v236, %v238
      %v240 = vld [vmem:[#allocation2] sm:$0xff]
      %241 = vmax.xlane.f32.xlu0 %v232
      %v242 = vpop.xlane.xlu0 %241
      %v243 = vmax.f32 %v240, %v242
      %245 = vset.pattern.permute.xlu0 0
      %246 = vperm.xlu0 %245, %v243
      %v247 = vpop.permute.xlu0 %246
      %v249 = vsub.f32 %v232, %v247
      %v250 = vmul.f32 %v249, 1.442695
      %v251 = vpow.pop %v250
      %v252 = vld [vmem:[#allocation3] sm:$0xff]
      %v253 = vsub.f32 %v240, %v243
      %v254 = vmul.f32 %v253, 1.442695
      %v255 = vpow.pop %v254
      %v256 = vmul.f32 %v252, %v255
      %257 = vadd.xlane.f32.xlu0 %v251
      %v258 = vpop.xlane.xlu0 %257
      %v259 = vadd.f32 %v256, %v258
      %vm260 = vcmask 7168
      %261 = vst.msk [vmem:[#allocation3] sm:$0xff] %vm260, %v259
      %262 = vst.msk [vmem:[#allocation2] sm:$0xff] %vm260, %v243
      %v263 = vld [vmem:[#allocation4] sm:$0xff]
      %264 = vset.pattern.permute.xlu0 0
      %265 = vperm.xlu0 %264, %v233
      %v266 = vpop.permute.xlu0 %265
      %vm267 = vcmp.eq.s32.totalorder %v239, %v266
      %v268 = vsel %vm267, %v232, 0.0
      %269 = vadd.xlane.f32.xlu0 %v268
      %v270 = vpop.xlane.xlu0 %269
      %v271 = vadd.f32 %v263, %v270
      %272 = vst.msk [vmem:[#allocation4] sm:$0xff] %vm260, %v271
      %v273 = vld [vmem:[#allocation5] sm:$0xff]
      %274 = vset.pattern.permute.xlu0 0
      %275 = vperm.xlu0 %274, %v234
      %v276 = vpop.permute.xlu0 %275
      %vm277 = vcmp.eq.s32.totalorder %v239, %v276
      %v278 = vsel %vm277, %v232, 0.0
      %279 = vadd.xlane.f32.xlu0 %v278
      %v280 = vpop.xlane.xlu0 %279
      %v281 = vadd.f32 %v273, %v280
      %282 = vst.msk [vmem:[#allocation5] sm:$0xff] %vm260, %v281
      // Predicated region
      $region37: #{tpu_custom_call.1} parent=31 // pred_check
        %p283 = pneg %p223
      $region38: #{tpu_custom_call.1} parent=31 // pred_check_branch
        %285 = sbr.rel (%p283) target = $region40
      $region39: #{tpu_custom_call.1} parent=31 // pred_region
        %v286 = vld [vmem:[#allocation2] sm:$0xff]
        %v287 = vld [vmem:[#allocation3] sm:$0xff]
        %v288 = vld [vmem:[#allocation4] sm:$0xff]
        %v289 = vld [vmem:[#allocation5] sm:$0xff]
        %v290 = vsub.f32 %v288, %v286
        %v291 = vmul.f32 %v290, 1.442695
        %v292 = vpow.pop %v291
        %v293 = vsub.f32 %v289, %v286
        %v294 = vmul.f32 %v293, 1.442695
        %v295 = vpow.pop %v294
        %v296 = vsub.f32 %v288, %v289
        %v297 = vsub.f32 %v287, %v292
        %v298 = vlog2.pop %v297
        %v299 = vmul.f32 %v298, 0.6931472
        %v300 = vsub.f32 %v296, %v299
        %v301 = vsub.f32 %v287, %v295
        %v302 = vlog2.pop %v301
        %v303 = vmul.f32 %v302, 0.6931472
        %v304 = vadd.f32 %v300, %v303
        %v305 = vsub.f32 0.0, %v304
        %v306 = vmax.f32 %v305, 0.0
        %v307 = vand.u32 2147483647, %v304
        %v308 = vsub.f32 0.0, %v307
        %v309 = vmul.f32 %v308, 1.442695
        %v310 = vpow.pop %v309
        %v311 = vadd.f32 %v310, 1.0
        %v312 = vlog2.pop %v311
        %v313 = vmul.f32 %v312, 0.6931472
        %v314 = vmul.f32 -0.5, %v310
        %v315 = vadd.f32 %v314, 1.0
        %v316 = vmul.f32 %v315, %v310
        %v317 = vand.u32 2147483647, %v310
        %vm318 = vcmp.lt.f32.partialorder %v317, 0.0004427343
        %v319 = vsel %vm318, %v316, %v313
        %v320 = vadd.f32 %v306, %v319
        %v321 = vlaneseq
        %v322 = vshrl.u32 %v321, 7
        %s323 = smul.u32 %s18, 8
        %v324 = vstv %s323
        %v325 = vadd.s32 %v322, %v324
        %vm326 = vcmp.lt.s32.totalorder %v325, 16
        %v327 = vsel %vm326, %v320, 0.0
        %328 = vst.msk [vmem:[%s222] sm:$0xff] %vm260, %v327
      $region40: #{tpu_custom_call.1} parent=31 // pred_fallthru
        _
      %p329 = scmp.lt.s32.totalorder %s18, 1
      %s330 = scalar_select %p329, %s18, 1
      %s331 = smul.addr %s330, 8
      %s332 = scalar_lea.vmem %s3, %s331
      // Predicated region
      $region41: #{tpu_custom_call.1} parent=31 // pred_check
        %p333 = pneg %p124
      $region42: #{tpu_custom_call.1} parent=31 // pred_check_branch
        %335 = sbr.rel (%p333) target = $region44
      $region43: #{tpu_custom_call.1} parent=31 // pred_region
        _
      $region44: #{tpu_custom_call.1} parent=31 // pred_fallthru
        _
    $region32: #{tpu_custom_call.1} parent=5 // pred_fallthru
      _
    %p336 = scmp.le.s32.totalorder 2, %s9
    // Predicated region
    $region45: #{tpu_custom_call.1} parent=5 // pred_check
      %p337 = pneg %p336
    $region46: #{tpu_custom_call.1} parent=5 // pred_check_branch
      %339 = sbr.rel (%p337) target = $region48
    $region47: #{tpu_custom_call.1} parent=5 // pred_region
      %s340 = ssub.s32 %s9, 2
      // Predicated region
      $region49: #{tpu_custom_call.1} parent=47 // pred_check
        %p341 = pneg %p130
      $region50: #{tpu_custom_call.1} parent=47 // pred_check_branch
        %343 = sbr.rel (%p341) target = $region52
      $region51: #{tpu_custom_call.1} parent=47 // pred_region
        %p344 = scmp.lt.s32.totalorder %s20, 1
        %s345 = scalar_select %p344, %s20, 1
        %s346 = smul.addr %s345, 8
        %s347 = scalar_lea.vmem %s3, %s346
      $region52: #{tpu_custom_call.1} parent=47 // pred_fallthru
        _
    $region48: #{tpu_custom_call.1} parent=5 // pred_fallthru
      _
  $region6: #{tpu_custom_call.1} parent=0 // loop_footer
    %s13 = sadd.s32 1, %s9
  $region7: #{tpu_custom_call.1} parent=0 // loop_footer_branch
    %8 = sbr.rel target = $region3
  $region8: #{tpu_custom_call.1} parent=0 // loop_exit
    _

</llo_original>
